<compile_context>
chip_gen: v7x
topology: tpu7x:2x2x1
jax: 0.10.0
libtpu: 0.0.40
codegen_flags: <defaults>
</compile_context>

<pallas_src>
import numpy as np
import jax
import jax.numpy as jnp
from jax.experimental import pallas as pl
from jax.experimental.pallas import tpu as pltpu


# ----------------------------------------------------------------------------
# Static tree structure (plays the role of the recursive nn.Module hierarchy).
# ----------------------------------------------------------------------------
class TreeNode:
    def __init__(self, index, is_leaf, branch_idx=None, leaf_idx=None):
        self.index = index            # Node._index
        self.is_leaf = is_leaf        # Node.is_leaf_node
        self.branch_idx = branch_idx  # out_map[self] for branches
        self.leaf_idx = leaf_idx      # row of leaf_params for leaves
        self.left = None
        self.right = None


def build_complete_tree(depth):
    """Complete binary tree; branch/leaf sub-indices assigned in pre-order
    (this is the `out_map` of the PyTorch module)."""
    counters = {"node": 0, "branch": 0, "leaf": 0}

    def build(d):
        idx = counters["node"]; counters["node"] += 1
        if d == 0:
            li = counters["leaf"]; counters["leaf"] += 1
            return TreeNode(idx, True, leaf_idx=li)
        bi = counters["branch"]; counters["branch"] += 1
        node = TreeNode(idx, False, branch_idx=bi)
        node.left = build(d - 1)
        node.right = build(d - 1)
        return node

    root = build(depth)
    return root, counters["node"], counters["branch"], counters["leaf"]


def build_subtree_mask(root, num_nodes, num_leaves):
    """M[l, n] = 1 iff leaf l lies in the subtree rooted at node n.
    Because (1-p) + p == 1 at every split, pa[node] == sum_l M[l, node] * pa_leaf[l]."""
    M = np.zeros((num_leaves, num_nodes), np.float32)

    def visit(node):
        if node.is_leaf:
            M[node.leaf_idx, node.index] = 1.0
            return [node.leaf_idx]
        leaves = visit(node.left) + visit(node.right)
        for l in leaves:
            M[l, node.index] = 1.0
        return leaves

    visit(root)
    return M


# ----------------------------------------------------------------------------
# Prologue kernel: per-leaf softmax of _dist_params (Node.distribution()).
# Grid-invariant, so it runs once outside the batch-tiled routing kernel.
# ----------------------------------------------------------------------------
def leaf_softmax_kernel(lp_ref, out_ref):
    lp = lp_ref[...].astype(jnp.float32)
    shifted = lp - jnp.max(lp, axis=1, keepdims=True)   # softmax(x - max(x))
    e = jnp.exp(shifted)
    out_ref[...] = e * pl.reciprocal(jnp.sum(e, axis=1, keepdims=True))


def compute_leaf_dists(leaf_params):
    NL, C = leaf_params.shape
    return pl.pallas_call(
        leaf_softmax_kernel,
        out_shape=jax.ShapeDtypeStruct((NL, C), jnp.float32),
        grid=(1,),
        in_specs=[pl.BlockSpec((NL, C), lambda i: (0, 0))],
        out_specs=pl.BlockSpec((NL, C), lambda i: (0, 0)),
    )(leaf_params)


# ----------------------------------------------------------------------------
# Main routing kernel: per-batch-tile soft routing.  The tree recursion is
# unrolled at trace time and only computes leaf arrival probabilities; the two
# outputs are produced by MXU matmuls.
# ----------------------------------------------------------------------------
def make_routing_kernel(root, num_leaves):
    def kernel(ps_ref, leaf_dists_ref, mask_ref, dists_ref, pa_ref):
        ps = ps_ref[...]                         # (TB, NB)
        one_minus_ps = 1.0 - ps                  # hoisted: one dense VPU op for all branches
        tb = ps.shape[0]

        leaf_pa = [None] * num_leaves

        def traverse(node, pa):                  # pa: (TB, 1) arrival probability
            if node.is_leaf:
                leaf_pa[node.leaf_idx] = pa
                return
            j = node.branch_idx
            p = ps[:, j:j + 1]                   # get_tree_probability for this branch
            q = one_minus_ps[:, j:j + 1]
            traverse(node.left, q * pa)          # node_attr[left, 'pa']  = (1-ps)*pa
            traverse(node.right, p * pa)         # node_attr[right, 'pa'] = ps*pa

        traverse(root, jnp.ones((tb, 1), dtype=jnp.float32))   # root pa = ones

        pa_leaves = jnp.concatenate(leaf_pa, axis=1)            # (TB, NL)

        # Mixture of leaf distributions == pa_leaves @ leaf_dists (one MXU op).
        dists_ref[...] = jnp.dot(pa_leaves, leaf_dists_ref[...],
                                 preferred_element_type=jnp.float32)
        # Arrival probabilities of every node (pre-order columns) via subtree mask.
        pa_ref[...] = jnp.dot(pa_leaves, mask_ref[...],
                              preferred_element_type=jnp.float32)

    return kernel


def node_forward(root, num_nodes, num_leaves, ps, leaf_params, block_b=128):
    B, NB = ps.shape
    NL, C = leaf_params.shape
    assert NL == num_leaves

    # One-time prologue (grid-invariant work kept out of the batch loop).
    leaf_dists = compute_leaf_dists(leaf_params)
    subtree_mask = jnp.asarray(build_subtree_mask(root, num_nodes, num_leaves))

    # Batch tile: multiple of 8 sublanes, sized well under the per-generation VMEM
    # scoped limit (v7x has half the VMEM of v5e/v6e; these tiles are tiny either way).
    tb = min(block_b, B)
    assert B % tb == 0, "batch must be divisible by the batch tile"
    grid = (pl.cdiv(B, tb),)

    kernel = make_routing_kernel(root, num_leaves)
    return pl.pallas_call(
        kernel,
        out_shape=(
            jax.ShapeDtypeStruct((B, C), jnp.float32),
            jax.ShapeDtypeStruct((B, num_nodes), jnp.float32),
        ),
        grid=grid,
        in_specs=[
            pl.BlockSpec((tb, NB), lambda i: (i, 0)),        # ps: batch-tiled
            pl.BlockSpec((NL, C), lambda i: (0, 0)),         # leaf_dists: resident
            pl.BlockSpec((NL, num_nodes), lambda i: (0, 0)), # subtree mask: resident
        ],
        out_specs=(
            pl.BlockSpec((tb, C), lambda i: (i, 0)),
            pl.BlockSpec((tb, num_nodes), lambda i: (i, 0)),
        ),
        compiler_params=pltpu.CompilerParams(
            dimension_semantics=("parallel",),               # shard batch tiles across TCs (v7x)
        ),
    )(ps, leaf_dists, subtree_mask)


# ----------------------------------------------------------------------------
# Pure-numpy reference (mirrors the PyTorch recursion exactly).
# ----------------------------------------------------------------------------
def reference_forward(root, num_nodes, ps, leaf_params):
    lp = np.asarray(leaf_params, np.float32)
    e = np.exp(lp - lp.max(axis=1, keepdims=True))
    leaf_dists = e / e.sum(axis=1, keepdims=True)
    B = ps.shape[0]; C = lp.shape[1]
    pa_cols = [None] * num_nodes

    def traverse(node, pa):
        pa_cols[node.index] = pa
        if node.is_leaf:
            return np.broadcast_to(leaf_dists[node.leaf_idx:node.leaf_idx + 1, :], (B, C))
        p = ps[:, node.branch_idx:node.branch_idx + 1]
        l = traverse(node.left, (1.0 - p) * pa)
        r = traverse(node.right, p * pa)
        return (1.0 - p) * l + p * r

    dists = traverse(root, np.ones((B, 1), np.float32))
    return dists, np.concatenate(pa_cols, axis=1)


if __name__ == "__main__":
    depth, B, C = 3, 256, 10
    root, num_nodes, num_branches, num_leaves = build_complete_tree(depth)

    key = jax.random.PRNGKey(0)
    k1, k2 = jax.random.split(key)
    # conv_net_output routing probabilities in (0,1), one column per branch.
    ps = jax.nn.sigmoid(jax.random.normal(k1, (B, num_branches), jnp.float32))
    # Deterministic (seeded) init of each leaf's `_dist_params`; random instead of
    # torch.zeros so the softmax is non-trivial.
    leaf_params = jax.random.normal(k2, (num_leaves, C), jnp.float32)

    dists, pa = node_forward(root, num_nodes, num_leaves, ps, leaf_params, block_b=128)
    dists, pa = jax.block_until_ready((dists, pa))

    ref_dists, ref_pa = reference_forward(root, num_nodes, np.asarray(ps), np.asarray(leaf_params))
    assert np.allclose(np.asarray(dists), ref_dists, atol=1e-5), "dists mismatch"
    assert np.allclose(np.asarray(pa), ref_pa, atol=1e-5), "pa mismatch"
    assert np.allclose(np.asarray(dists).sum(axis=1), 1.0, atol=1e-5)  # mixture of softmaxes sums to 1
    print("KERNEL_OK")
</pallas_src>

<mosaic_0001>
module attributes {stable_mosaic.version = 11 : i64} {
  func.func @leaf_softmax_kernel(%arg0: i32, %arg1: memref<8x10xf32, #tpu.memory_space<vmem>>, %arg2: memref<8x10xf32, #tpu.memory_space<vmem>>) attributes {dimension_semantics = [#tpu.dimension_semantics<arbitrary>], iteration_bounds = array<i64: 1>, scalar_prefetch = 0 : i64, scratch_operands = 0 : i64, tpu.core_type = #tpu.core_type<tc>, window_params = [{pipeline_mode = #tpu.pipeline_mode<synchronous>, transform_indices = @transform_0, window_bounds = array<i64: 8, 10>}, {pipeline_mode = #tpu.pipeline_mode<synchronous>, transform_indices = @transform_1, window_bounds = array<i64: 8, 10>}]} {
    %c0 = arith.constant 0 : index
    %c0_0 = arith.constant 0 : index
    %0 = vector.load %arg1[%c0, %c0_0] : memref<8x10xf32, #tpu.memory_space<vmem>>, vector<8x10xf32>
    %cst = arith.constant dense<0xFF800000> : vector<8xf32>
    %1 = vector.multi_reduction <maximumf>, %0, %cst [1] : vector<8x10xf32> to vector<8xf32>
    %2 = vector.shape_cast %1 : vector<8xf32> to vector<8x1xf32>
    %3 = vector.broadcast %2 : vector<8x1xf32> to vector<8x10xf32>
    %4 = arith.subf %0, %3 : vector<8x10xf32>
    %5 = math.exp %4 : vector<8x10xf32>
    %cst_1 = arith.constant dense<0.000000e+00> : vector<8xf32>
    %6 = vector.multi_reduction <add>, %5, %cst_1 [1] : vector<8x10xf32> to vector<8xf32>
    %7 = vector.shape_cast %6 : vector<8xf32> to vector<8x1xf32>
    %8 = tpu.reciprocal %7 : vector<8x1xf32> -> vector<8x1xf32>
    %9 = vector.broadcast %8 : vector<8x1xf32> to vector<8x10xf32>
    %10 = arith.mulf %5, %9 : vector<8x10xf32>
    %c0_2 = arith.constant 0 : index
    %c0_3 = arith.constant 0 : index
    %11 = vector.load %arg2[%c0_2, %c0_3] : memref<8x10xf32, #tpu.memory_space<vmem>>, vector<8x10xf32>
    tpu.vector_store %arg2[%c0_2, %c0_3], %10 {strides = array<i32>} : memref<8x10xf32, #tpu.memory_space<vmem>>, vector<8x10xf32>,
    return
  }
  func.func @transform_0(%arg0: i32) -> (i32, i32) {
    %c0_i32 = arith.constant 0 : i32
    %c0_i32_0 = arith.constant 0 : i32
    %c0_i32_1 = arith.constant 0 : i32
    return %c0_i32, %c0_i32_0 : i32, i32
  }
  func.func @transform_1(%arg0: i32) -> (i32, i32) {
    %c0_i32 = arith.constant 0 : i32
    %c0_i32_0 = arith.constant 0 : i32
    %c0_i32_1 = arith.constant 0 : i32
    return %c0_i32, %c0_i32_0 : i32, i32
  }
}

</mosaic_0001>

<llo_original>
// kernel: tpu_custom_call.1
$region0: #{tpu_custom_call.1}
  #allocation0 [shape = 'u32[]', space=smem, size = 0x4, offset = 0x4, fixed_abs, tag = 'smem constant byte address 0x4 - core index']
  #allocation1 [shape = 'u32[144,128]{1,0:T(1,128)}', space=vmem, size = 0x12000, scoped, tag = 'internal scratch']
  %s0 = inlined_call_operand.hbm [shape: f32[8,10], index: 0, kind: input, shape index: {}]
  %s1 = inlined_call_operand.hbm [shape: f32[8,10], index: 1, kind: output, shape index: {}]
  %s2 = sld [smem:[#allocation0]]
  $region18: #{tpu_custom_call.1} parent=0
    _
  %s4 = ssub.s32 1, %s2
  %s5 = scalar_select 0, %s4, %s2
  $region1: #{tpu_custom_call.1} parent=0
    #allocation2 [shape = 'u8[4096]{0}', space=vmem, size = 0x1000, scoped, tag = 'input window, operand 0, single buffered']
    #allocation3 [shape = 's32[1]{0}', space=sflag, size = 0x4, scoped, tag = 'scoped memory for tpu_custom_call.1']
    #allocation4 [shape = 's32[1]{0}', space=sflag, size = 0x4, scoped, tag = 'scoped memory for tpu_custom_call.1']
    #allocation5 [shape = 'u8[4096]{0}', space=vmem, size = 0x1000, scoped, tag = 'output window, operand 0, single buffered']
    %6 = vsyncpa [#allocation3], 0
    %7 = vsyncpa [#allocation4], 0
    // Predicated region
    $region2: #{tpu_custom_call.1} parent=1 // pred_check
      _
    $region3: #{tpu_custom_call.1} parent=1 // pred_check_branch
      %9 = sbr.rel (0) target = $region5
    $region4: #{tpu_custom_call.1} parent=1 // pred_region
      %s11 = ssub.s32 128, 128
      %12 = vsyncadd [#allocation3], %s11
      %s14 = sshll.u32 [#allocation2], 4
      %s15 = int_to_ptr.vmem [resolvable:$true] %s14
      %17 = dma.hbm_to_vmem [thread:$0]  %s0, 128, %s15, [#allocation3]
    $region5: #{tpu_custom_call.1} parent=1 // pred_fallthru
      _
    // Predicated region
    $region6: #{tpu_custom_call.1} parent=1 // pred_check
      _
    $region7: #{tpu_custom_call.1} parent=1 // pred_check_branch
      %19 = sbr.rel (0) target = $region9
    $region8: #{tpu_custom_call.1} parent=1 // pred_region
      %20 = dma.done [#allocation3], 128
    $region9: #{tpu_custom_call.1} parent=1 // pred_fallthru
      _
    %v21 = vld [vmem:[#allocation2] sm:$0xff]
    %vm22 = vcmask 80896
    %v23 = vsel %vm22, %v21, -inf
    %24 = vmax.xlane.f32.xlu0 %v23
    %v25 = vpop.xlane.xlu0 %24
    %v26 = vsub.f32 %v21, %v25
    %v27 = vmul.f32 %v26, 1.442695
    %v28 = vpow.pop %v27
    %v29 = vsel %vm22, %v28, 0.0
    %30 = vadd.xlane.f32.xlu0 %v29
    %v31 = vpop.xlane.xlu0 %30
    %v32 = vrcp.pop %v31
    %v33 = vmul.f32 %v28, %v32
    %34 = vst.msk [vmem:[#allocation5] sm:$0xff] %vm22, %v33
    // Predicated region
    $region10: #{tpu_custom_call.1} parent=1 // pred_check
      _
    $region11: #{tpu_custom_call.1} parent=1 // pred_check_branch
      %36 = sbr.rel (0) target = $region13
    $region12: #{tpu_custom_call.1} parent=1 // pred_region
      %s38 = ssub.s32 128, 128
      %39 = vsyncadd [#allocation4], %s38
      %s41 = sshll.u32 [#allocation5], 4
      %s42 = int_to_ptr.vmem [resolvable:$true] %s41
      %44 = dma.vmem_to_hbm [thread:$0]  %s42, 128, %s1, [#allocation4]
    $region13: #{tpu_custom_call.1} parent=1 // pred_fallthru
      _
    // Predicated region
    $region14: #{tpu_custom_call.1} parent=1 // pred_check
      _
    $region15: #{tpu_custom_call.1} parent=1 // pred_check_branch
      %46 = sbr.rel (0) target = $region17
    $region16: #{tpu_custom_call.1} parent=1 // pred_region
      %47 = dma.done [#allocation4], 128
    $region17: #{tpu_custom_call.1} parent=1 // pred_fallthru
      _
    %48 = vsyncpa [#allocation3], 1
    %49 = vsyncpa [#allocation4], 1

</llo_original>
